<compile_context>
chip_gen: v7x
topology: tpu7x:2x2x1
jax: 0.10.0
libtpu: 0.0.40
codegen_flags: <defaults>
</compile_context>

<pallas_src>
import functools

import jax
import jax.numpy as jnp
from jax.experimental import pallas as pl
from jax.experimental.pallas import tpu as pltpu

INPUT_DIM = 7
HIDDEN = 64
HALF = HIDDEN // 2
N_TOWERS = 4
EPS = 1e-5
LANE = 128
MAX_TILE = 8192          # v7x-safe ceiling (64 MiB physical VMEM)


def _round_up(x, m):
    return ((x + m - 1) // m) * m


def _cdiv(a, b):
    return (a + b - 1) // b


def _default_bf16_elementwise():
    # bf16 VALU exists on v6e / v7x only; f32 elementwise everywhere else.
    try:
        kind = jax.devices()[0].device_kind.lower()
    except Exception:
        return False
    return ("v6" in kind) or ("v7" in kind) or ("7x" in kind) or ("tpu7" in kind)


_DEFAULT_BF16_EW = _default_bf16_elementwise()


# --------------------------------------------------------------------------
# Kernel: feature-major layout, batch on lanes (lane-dense loads and stores).
# --------------------------------------------------------------------------
def _fnn_kernel(x_ref, w0_ref, wmid_ref, wt2_ref, bias_ref, o_ref, *, ew_dtype):
    # x: (8, tile) bf16; row 7 is all-ones -> layer-0 bias rides in the matmul.
    x = x_ref[...]

    # Packed bias / BN vectors (f32 in HBM; cast once to the elementwise dtype).
    b1 = bias_ref[0:HIDDEN, 1:2].astype(ew_dtype)
    b2 = bias_ref[HIDDEN:2 * HIDDEN, 1:2].astype(ew_dtype)
    bn_s = bias_ref[0:HIDDEN, 2:3].astype(ew_dtype)
    bn_b = bias_ref[HIDDEN:2 * HIDDEN, 2:3].astype(ew_dtype)
    bt1 = bias_ref[:, 0:1].astype(ew_dtype)
    bt2 = bias_ref[0:N_TOWERS, 3:4]                       # stays f32

    # Static slices of the merged (256, 64) bf16 weight (zero-cost views).
    w1 = wmid_ref[0:HIDDEN, :]                            # (64, 64)
    w2 = wmid_ref[HIDDEN:2 * HIDDEN, :]                   # (64, 64)
    wt1 = wmid_ref[2 * HIDDEN:4 * HIDDEN, :]              # (128, 64)

    # NOTE(MXU orientation): the small (<=128 x 64) weight should be the
    # stationary operand with the tile_n dimension streaming; verified shapes
    # keep weights as LHS of every dot.

    # input_filter (+ folded shared-layer-1 BN1, bias via ones row) -> ReLU
    h = jnp.dot(w0_ref[...], x, preferred_element_type=jnp.float32)
    h = jnp.maximum(h.astype(ew_dtype), 0)

    # shared layer 1: Linear (+ folded BN2) -> ReLU -> Dropout(id)
    h = jnp.dot(w1, h.astype(jnp.bfloat16), preferred_element_type=jnp.float32)
    h = jnp.maximum(h.astype(ew_dtype) + b1, 0)

    # shared layer 2: BN1 (follows a ReLU -> explicit scale/shift) -> ReLU
    h = jnp.maximum(h * bn_s + bn_b, 0)

    # shared layer 2: Linear (+ folded BN2) -> ReLU -> Dropout(id)
    h = jnp.dot(w2, h.astype(jnp.bfloat16), preferred_element_type=jnp.float32)
    h = jnp.maximum(h.astype(ew_dtype) + b2, 0)

    # 4 towers, fused first Linear (64 -> 128) (+ folded BN) -> ReLU
    t = jnp.dot(wt1, h.astype(jnp.bfloat16), preferred_element_type=jnp.float32)
    t = jnp.maximum(t.astype(ew_dtype) + bt1, 0)

    # Fused second Linear: block-diagonal (4, 128) @ (128, tile)
    out = jnp.dot(wt2_ref[...], t.astype(jnp.bfloat16),
                  preferred_element_type=jnp.float32) + bt2

    o_ref[...] = out.astype(o_ref.dtype)


# --------------------------------------------------------------------------
# Tiling: big lane tiles, >=2 grid steps when possible (v7x megacore),
# padding waste bounded by ~one LANE per step.
# --------------------------------------------------------------------------
def _choose_tiling(n, tile_n):
    tile_n = min(_round_up(max(int(tile_n), LANE), LANE), MAX_TILE)
    n_ceil = _round_up(max(n, 1), LANE)
    steps = max(_cdiv(n_ceil, tile_n), 1)
    if steps == 1 and n_ceil >= 2 * LANE:
        steps = 2                       # keep both v7x TensorCores busy
    tile = _round_up(_cdiv(n_ceil, steps), LANE)
    return tile, tile * steps


# --------------------------------------------------------------------------
# Wrapper
# --------------------------------------------------------------------------
@functools.partial(
    jax.jit,
    static_argnames=("tile_n", "bf16_elementwise", "feature_major_output"))
def fnn_forward(x, kparams, tile_n=4096, bf16_elementwise=_DEFAULT_BF16_EW,
                feature_major_output=False):
    """x: any shape with last dim == INPUT_DIM. Returns (N, 4) float32
    (or (4, N) when feature_major_output=True)."""
    x2 = x.reshape(-1, x.shape[-1]).astype(jnp.float32)   # x.view(-1, input_dim)
    n = x2.shape[0]

    w0e, wmid, wt2t, bias_pack = kparams
    ew_dtype = jnp.bfloat16 if bf16_elementwise else jnp.float32

    tile, n_pad = _choose_tiling(n, tile_n)
    grid = (n_pad // tile,)

    # Feature-major (batch on lanes), features padded 7 -> 8 with a ones row
    # (layer-0 bias), cast to bf16 before the transpose to halve its traffic.
    x_aug = jnp.concatenate([x2, jnp.ones((n, 1), jnp.float32)], axis=1)
    xt = jnp.pad(x_aug.astype(jnp.bfloat16).T, ((0, 0), (0, n_pad - n)))

    full = lambda a: pl.BlockSpec(a.shape, lambda i: (0, 0))

    macs_per_row = ((INPUT_DIM + 1) * HIDDEN + 2 * HIDDEN * HIDDEN
                    + HIDDEN * N_TOWERS * HALF + N_TOWERS * HALF * N_TOWERS)
    param_bytes = sum(int(a.size) * a.dtype.itemsize for a in kparams)
    bytes_accessed = n_pad * ((INPUT_DIM + 1) * 2 + N_TOWERS * 4) + param_bytes

    out_t = pl.pallas_call(
        functools.partial(_fnn_kernel, ew_dtype=ew_dtype),
        out_shape=jax.ShapeDtypeStruct((N_TOWERS, n_pad), jnp.float32),
        grid=grid,
        in_specs=[
            pl.BlockSpec((INPUT_DIM + 1, tile), lambda i: (0, i)),
            full(w0e), full(wmid), full(wt2t), full(bias_pack),
        ],
        out_specs=pl.BlockSpec((N_TOWERS, tile), lambda i: (0, i)),
        compiler_params=pltpu.CompilerParams(
            dimension_semantics=("parallel",),
            vmem_limit_bytes=32 * 1024 * 1024,
        ),
        cost_estimate=pl.CostEstimate(
            flops=2 * n_pad * macs_per_row, transcendentals=0,
            bytes_accessed=bytes_accessed),
    )(xt, w0e, wmid, wt2t, bias_pack)

    if feature_major_output:
        return out_t[:, :n]                       # (4, N), lane-dense layout
    # PyTorch output layout: (N, 4) == torch.cat(tower_outs, dim=1)
    return out_t[:, :n].T


# --------------------------------------------------------------------------
# Parameter construction (PyTorch-like raw params) and kernel-param prep
# --------------------------------------------------------------------------
def init_raw_params(key):
    ks = iter(jax.random.split(key, 40))

    def lin(fi, fo):
        kw, kb = jax.random.split(next(ks))
        w = jax.random.normal(kw, (fi, fo), jnp.float32) / jnp.sqrt(fi)
        b = 0.1 * jax.random.normal(kb, (fo,), jnp.float32)
        return w, b

    def bn(f):
        kg, kb, km, kv = jax.random.split(next(ks), 4)
        gamma = 1.0 + 0.1 * jax.random.normal(kg, (f,), jnp.float32)
        beta = 0.1 * jax.random.normal(kb, (f,), jnp.float32)
        mean = 0.1 * jax.random.normal(km, (f,), jnp.float32)
        var = jnp.abs(1.0 + 0.1 * jax.random.normal(kv, (f,), jnp.float32))
        return (gamma, beta, mean, var)

    return {
        "input_filter": lin(INPUT_DIM, HIDDEN),
        "shared": [
            {"bn1": bn(HIDDEN), "lin": lin(HIDDEN, HIDDEN), "bn2": bn(HIDDEN)}
            for _ in range(2)
        ],
        "towers": [
            {"lin1": lin(HIDDEN, HALF), "bn": bn(HALF), "lin2": lin(HALF, 1)}
            for _ in range(N_TOWERS)
        ],
    }


def _fold_scale_shift(bn):
    gamma, beta, mean, var = bn
    scale = gamma / jnp.sqrt(var + EPS)
    shift = beta - mean * scale
    return scale, shift


def prepare_kernel_params(raw):
    """Fold eval-mode BatchNorms, fuse the 4 towers, merge/pack operands,
    transpose to the feature-major layout and cast matmul weights to bf16."""
    w0, b0 = raw["input_filter"]
    l1, l2 = raw["shared"]

    s, sh = _fold_scale_shift(l1["bn1"])          # Linear -> BN folds
    w0f, b0f = w0 * s, b0 * s + sh

    w1, b1 = l1["lin"]
    s, sh = _fold_scale_shift(l1["bn2"])
    w1f, b1f = w1 * s, b1 * s + sh

    bn_s, bn_b = _fold_scale_shift(l2["bn1"])     # post-ReLU BN stays explicit

    w2, b2 = l2["lin"]
    s, sh = _fold_scale_shift(l2["bn2"])
    w2f, b2f = w2 * s, b2 * s + sh

    # Fuse towers: first Linears concatenated, second Linears block-diagonal.
    wt1_cols, bt1_vals, bt2_vals = [], [], []
    wt2 = jnp.zeros((N_TOWERS * HALF, N_TOWERS), jnp.float32)
    for t, tw in enumerate(raw["towers"]):
        tw1, tb1 = tw["lin1"]
        s, sh = _fold_scale_shift(tw["bn"])
        wt1_cols.append(tw1 * s)
        bt1_vals.append(tb1 * s + sh)
        tw2, tb2 = tw["lin2"]
        wt2 = wt2.at[t * HALF:(t + 1) * HALF, t].set(tw2[:, 0])
        bt2_vals.append(tb2)
    wt1f = jnp.concatenate(wt1_cols, axis=1)      # (64, 128)
    bt1f = jnp.concatenate(bt1_vals, axis=0)      # (128,)
    bt2f = jnp.concatenate(bt2_vals, axis=0)      # (4,)

    # Feature-major weights; layer-0 bias becomes an extra input column.
    w0e = jnp.concatenate([w0f.T, b0f[:, None]], axis=1).astype(jnp.bfloat16)  # (64, 8)
    wmid = jnp.concatenate([w1f.T, w2f.T, wt1f.T], axis=0).astype(jnp.bfloat16)  # (256, 64)
    wt2t = wt2.T.astype(jnp.bfloat16)             # (4, 128)

    # One packed f32 bias operand: (128, 4)
    #   col0 = bt1 (128), col1 = [b1; b2], col2 = [bn_s; bn_b], col3 = [bt2; 0...]
    bias_pack = jnp.stack([
        bt1f,
        jnp.concatenate([b1f, b2f]),
        jnp.concatenate([bn_s, bn_b]),
        jnp.concatenate([bt2f, jnp.zeros((N_TOWERS * HALF - N_TOWERS,), jnp.float32)]),
    ], axis=1).astype(jnp.float32)

    return (w0e, wmid, wt2t, bias_pack)


# --------------------------------------------------------------------------
# References
# --------------------------------------------------------------------------
def _bn_eval(h, bn):
    gamma, beta, mean, var = bn
    return (h - mean) / jnp.sqrt(var + EPS) * gamma + beta


def fnn_reference(x, raw):
    """Pure-JAX f32 reference with exact PyTorch eval-mode forward semantics."""
    h = x.reshape(-1, x.shape[-1])
    w0, b0 = raw["input_filter"]
    h = h @ w0 + b0
    for layer in raw["shared"]:
        h = jnp.maximum(_bn_eval(h, layer["bn1"]), 0.0)   # BN, ReLU, Dropout(id)
        w, b = layer["lin"]
        h = h @ w + b
        h = jnp.maximum(_bn_eval(h, layer["bn2"]), 0.0)
    outs = []
    for tw in raw["towers"]:
        w1, b1 = tw["lin1"]
        t = h @ w1 + b1
        t = jnp.maximum(_bn_eval(t, tw["bn"]), 0.0)
        w2, b2 = tw["lin2"]
        outs.append(t @ w2 + b2)
    return jnp.concatenate(outs, axis=1)


def fnn_kernel_reference(x, kparams, ew_dtype=jnp.float32):
    """Numerics-matched reference: identical folding, packing, bf16 casts and
    elementwise dtype as the Pallas kernel."""
    w0e, wmid, wt2t, bias = kparams
    x2 = x.reshape(-1, x.shape[-1]).astype(jnp.float32)
    n = x2.shape[0]
    xt = jnp.concatenate([x2, jnp.ones((n, 1), jnp.float32)],
                         axis=1).astype(jnp.bfloat16).T

    b1 = bias[0:HIDDEN, 1:2].astype(ew_dtype)
    b2 = bias[HIDDEN:2 * HIDDEN, 1:2].astype(ew_dtype)
    bn_s = bias[0:HIDDEN, 2:3].astype(ew_dtype)
    bn_b = bias[HIDDEN:2 * HIDDEN, 2:3].astype(ew_dtype)
    bt1 = bias[:, 0:1].astype(ew_dtype)
    bt2 = bias[0:N_TOWERS, 3:4]
    w1 = wmid[0:HIDDEN]; w2 = wmid[HIDDEN:2 * HIDDEN]; wt1 = wmid[2 * HIDDEN:]

    def mm(w, h):
        return jnp.dot(w, h.astype(jnp.bfloat16),
                       preferred_element_type=jnp.float32)

    h = jnp.maximum(mm(w0e, xt).astype(ew_dtype), 0)
    h = jnp.maximum(mm(w1, h).astype(ew_dtype) + b1, 0)
    h = jnp.maximum(h * bn_s + bn_b, 0)
    h = jnp.maximum(mm(w2, h).astype(ew_dtype) + b2, 0)
    t = jnp.maximum(mm(wt1, h).astype(ew_dtype) + bt1, 0)
    return (mm(wt2t, t) + bt2).T


# --------------------------------------------------------------------------
if __name__ == "__main__":
    key = jax.random.PRNGKey(0)
    k_x, k_p = jax.random.split(key)

    # small input: (batch=2, seq=8, input_dim=7) -> flattened to (16, 7)
    x = jax.random.normal(k_x, (2, 8, INPUT_DIM), jnp.float32)
    raw = init_raw_params(k_p)
    kparams = prepare_kernel_params(raw)

    out = fnn_forward(x, kparams)
    out = jax.block_until_ready(out)
    assert out.shape == (16, N_TOWERS)

    # Tight check: kernel vs a pure-JAX model with identical folding/casts.
    ew_dtype = jnp.bfloat16 if _DEFAULT_BF16_EW else jnp.float32
    tight_tol = 3e-2 if ew_dtype == jnp.bfloat16 else 2e-3
    ref_tight = fnn_kernel_reference(x, kparams, ew_dtype=ew_dtype)
    assert jnp.allclose(out, ref_tight, atol=tight_tol, rtol=tight_tol), \
        "kernel mismatch vs numerics-matched reference"

    # Loose check: kernel vs full-f32 PyTorch eval-mode semantics
    # (difference comes only from bf16 MXU operands / bf16 elementwise).
    ref_f32 = fnn_reference(x, raw)
    assert jnp.allclose(out, ref_f32, atol=0.25, rtol=0.1), \
        "kernel mismatch vs f32 reference"

    print("KERNEL_OK")
</pallas_src>

<mosaic_0001>
module attributes {stable_mosaic.version = 11 : i64} {
  func.func @_fnn_kernel(%arg0: i32, %arg1: memref<8x128xbf16, #tpu.memory_space<vmem>>, %arg2: memref<64x8xbf16, #tpu.memory_space<vmem>>, %arg3: memref<256x64xbf16, #tpu.memory_space<vmem>>, %arg4: memref<4x128xbf16, #tpu.memory_space<vmem>>, %arg5: memref<128x4xf32, #tpu.memory_space<vmem>>, %arg6: memref<4x128xf32, #tpu.memory_space<vmem>>) attributes {dimension_semantics = [#tpu.dimension_semantics<parallel>], iteration_bounds = array<i64: 1>, scalar_prefetch = 0 : i64, scratch_operands = 0 : i64, tpu.core_type = #tpu.core_type<tc>, window_params = [{transform_indices = @transform_0, window_bounds = array<i64: 8, 128>}, {pipeline_mode = #tpu.pipeline_mode<synchronous>, transform_indices = @transform_1, window_bounds = array<i64: 64, 8>}, {pipeline_mode = #tpu.pipeline_mode<synchronous>, transform_indices = @transform_2, window_bounds = array<i64: 256, 64>}, {pipeline_mode = #tpu.pipeline_mode<synchronous>, transform_indices = @transform_3, window_bounds = array<i64: 4, 128>}, {pipeline_mode = #tpu.pipeline_mode<synchronous>, transform_indices = @transform_4, window_bounds = array<i64: 128, 4>}, {transform_indices = @transform_5, window_bounds = array<i64: 4, 128>}]} {
    %c0 = arith.constant 0 : index
    %c0_0 = arith.constant 0 : index
    %0 = vector.load %arg1[%c0, %c0_0] : memref<8x128xbf16, #tpu.memory_space<vmem>>, vector<8x128xbf16>
    %c0_1 = arith.constant 0 : index
    %c1 = arith.constant 1 : index
    %1 = vector.load %arg5[%c0_1, %c1] : memref<128x4xf32, #tpu.memory_space<vmem>>, vector<64x1xf32>
    %c64 = arith.constant 64 : index
    %c1_2 = arith.constant 1 : index
    %2 = vector.load %arg5[%c64, %c1_2] : memref<128x4xf32, #tpu.memory_space<vmem>>, vector<64x1xf32>
    %c0_3 = arith.constant 0 : index
    %c2 = arith.constant 2 : index
    %3 = vector.load %arg5[%c0_3, %c2] : memref<128x4xf32, #tpu.memory_space<vmem>>, vector<64x1xf32>
    %c64_4 = arith.constant 64 : index
    %c2_5 = arith.constant 2 : index
    %4 = vector.load %arg5[%c64_4, %c2_5] : memref<128x4xf32, #tpu.memory_space<vmem>>, vector<64x1xf32>
    %c0_6 = arith.constant 0 : index
    %c0_7 = arith.constant 0 : index
    %5 = vector.load %arg5[%c0_6, %c0_7] : memref<128x4xf32, #tpu.memory_space<vmem>>, vector<128x1xf32>
    %c0_8 = arith.constant 0 : index
    %c3 = arith.constant 3 : index
    %6 = vector.load %arg5[%c0_8, %c3] : memref<128x4xf32, #tpu.memory_space<vmem>>, vector<4x1xf32>
    %c0_9 = arith.constant 0 : index
    %c0_10 = arith.constant 0 : index
    %7 = vector.load %arg3[%c0_9, %c0_10] : memref<256x64xbf16, #tpu.memory_space<vmem>>, vector<64x64xbf16>
    %c64_11 = arith.constant 64 : index
    %c0_12 = arith.constant 0 : index
    %8 = vector.load %arg3[%c64_11, %c0_12] : memref<256x64xbf16, #tpu.memory_space<vmem>>, vector<64x64xbf16>
    %c128 = arith.constant 128 : index
    %c0_13 = arith.constant 0 : index
    %9 = vector.load %arg3[%c128, %c0_13] : memref<256x64xbf16, #tpu.memory_space<vmem>>, vector<128x64xbf16>
    %c0_14 = arith.constant 0 : index
    %c0_15 = arith.constant 0 : index
    %10 = vector.load %arg2[%c0_14, %c0_15] : memref<64x8xbf16, #tpu.memory_space<vmem>>, vector<64x8xbf16>
    %cst = arith.constant dense<0.000000e+00> : vector<64x128xf32>
    %11 = tpu.matmul %10, %0, %cst {dimension_numbers = #tpu.dot_dimension_numbers<[1], [0], [0], [1], [0, 0, 1, 1], [], []>} : vector<64x8xbf16>, vector<8x128xbf16>, vector<64x128xf32> -> vector<64x128xf32>
    %cst_16 = arith.constant 0.000000e+00 : f32
    %12 = vector.broadcast %cst_16 : f32 to vector<64x128xf32>
    %13 = arith.maximumf %11, %12 : vector<64x128xf32>
    %14 = arith.truncf %13 : vector<64x128xf32> to vector<64x128xbf16>
    %cst_17 = arith.constant dense<0.000000e+00> : vector<64x128xf32>
    %15 = tpu.matmul %7, %14, %cst_17 {dimension_numbers = #tpu.dot_dimension_numbers<[1], [0], [0], [1], [0, 0, 1, 1], [], []>} : vector<64x64xbf16>, vector<64x128xbf16>, vector<64x128xf32> -> vector<64x128xf32>
    %16 = vector.broadcast %1 : vector<64x1xf32> to vector<64x128xf32>
    %17 = arith.addf %15, %16 : vector<64x128xf32>
    %cst_18 = arith.constant 0.000000e+00 : f32
    %18 = vector.broadcast %cst_18 : f32 to vector<64x128xf32>
    %19 = arith.maximumf %17, %18 : vector<64x128xf32>
    %20 = vector.broadcast %3 : vector<64x1xf32> to vector<64x128xf32>
    %21 = arith.mulf %19, %20 : vector<64x128xf32>
    %22 = vector.broadcast %4 : vector<64x1xf32> to vector<64x128xf32>
    %23 = arith.addf %21, %22 : vector<64x128xf32>
    %cst_19 = arith.constant 0.000000e+00 : f32
    %24 = vector.broadcast %cst_19 : f32 to vector<64x128xf32>
    %25 = arith.maximumf %23, %24 : vector<64x128xf32>
    %26 = arith.truncf %25 : vector<64x128xf32> to vector<64x128xbf16>
    %cst_20 = arith.constant dense<0.000000e+00> : vector<64x128xf32>
    %27 = tpu.matmul %8, %26, %cst_20 {dimension_numbers = #tpu.dot_dimension_numbers<[1], [0], [0], [1], [0, 0, 1, 1], [], []>} : vector<64x64xbf16>, vector<64x128xbf16>, vector<64x128xf32> -> vector<64x128xf32>
    %28 = vector.broadcast %2 : vector<64x1xf32> to vector<64x128xf32>
    %29 = arith.addf %27, %28 : vector<64x128xf32>
    %cst_21 = arith.constant 0.000000e+00 : f32
    %30 = vector.broadcast %cst_21 : f32 to vector<64x128xf32>
    %31 = arith.maximumf %29, %30 : vector<64x128xf32>
    %32 = arith.truncf %31 : vector<64x128xf32> to vector<64x128xbf16>
    %cst_22 = arith.constant dense<0.000000e+00> : vector<128x128xf32>
    %33 = tpu.matmul %9, %32, %cst_22 {dimension_numbers = #tpu.dot_dimension_numbers<[1], [0], [0], [1], [0, 0, 1, 1], [], []>} : vector<128x64xbf16>, vector<64x128xbf16>, vector<128x128xf32> -> vector<128x128xf32>
    %34 = vector.broadcast %5 : vector<128x1xf32> to vector<128x128xf32>
    %35 = arith.addf %33, %34 : vector<128x128xf32>
    %cst_23 = arith.constant 0.000000e+00 : f32
    %36 = vector.broadcast %cst_23 : f32 to vector<128x128xf32>
    %37 = arith.maximumf %35, %36 : vector<128x128xf32>
    %c0_24 = arith.constant 0 : index
    %c0_25 = arith.constant 0 : index
    %38 = vector.load %arg4[%c0_24, %c0_25] : memref<4x128xbf16, #tpu.memory_space<vmem>>, vector<4x128xbf16>
    %39 = arith.truncf %37 : vector<128x128xf32> to vector<128x128xbf16>
    %cst_26 = arith.constant dense<0.000000e+00> : vector<4x128xf32>
    %40 = tpu.matmul %38, %39, %cst_26 {dimension_numbers = #tpu.dot_dimension_numbers<[1], [0], [0], [1], [0, 0, 1, 1], [], []>} : vector<4x128xbf16>, vector<128x128xbf16>, vector<4x128xf32> -> vector<4x128xf32>
    %41 = vector.broadcast %6 : vector<4x1xf32> to vector<4x128xf32>
    %42 = arith.addf %40, %41 : vector<4x128xf32>
    %c0_27 = arith.constant 0 : index
    %c0_28 = arith.constant 0 : index
    %43 = vector.load %arg6[%c0_27, %c0_28] : memref<4x128xf32, #tpu.memory_space<vmem>>, vector<4x128xf32>
    tpu.vector_store %arg6[%c0_27, %c0_28], %42 {strides = array<i32>} : memref<4x128xf32, #tpu.memory_space<vmem>>, vector<4x128xf32>,
    return
  }
  func.func @transform_0(%arg0: i32) -> (i32, i32) {
    %c0_i32 = arith.constant 0 : i32
    %c0_i32_0 = arith.constant 0 : i32
    return %c0_i32, %arg0 : i32, i32
  }
  func.func @transform_1(%arg0: i32) -> (i32, i32) {
    %c0_i32 = arith.constant 0 : i32
    %c0_i32_0 = arith.constant 0 : i32
    %c0_i32_1 = arith.constant 0 : i32
    return %c0_i32, %c0_i32_0 : i32, i32
  }
  func.func @transform_2(%arg0: i32) -> (i32, i32) {
    %c0_i32 = arith.constant 0 : i32
    %c0_i32_0 = arith.constant 0 : i32
    %c0_i32_1 = arith.constant 0 : i32
    return %c0_i32, %c0_i32_0 : i32, i32
  }
  func.func @transform_3(%arg0: i32) -> (i32, i32) {
    %c0_i32 = arith.constant 0 : i32
    %c0_i32_0 = arith.constant 0 : i32
    %c0_i32_1 = arith.constant 0 : i32
    return %c0_i32, %c0_i32_0 : i32, i32
  }
  func.func @transform_4(%arg0: i32) -> (i32, i32) {
    %c0_i32 = arith.constant 0 : i32
    %c0_i32_0 = arith.constant 0 : i32
    %c0_i32_1 = arith.constant 0 : i32
    return %c0_i32, %c0_i32_0 : i32, i32
  }
  func.func @transform_5(%arg0: i32) -> (i32, i32) {
    %c0_i32 = arith.constant 0 : i32
    %c0_i32_0 = arith.constant 0 : i32
    return %c0_i32, %arg0 : i32, i32
  }
}

</mosaic_0001>

<llo_original>
// kernel: fnn_forward.1
$region0: #{fnn_forward.1}
  #allocation0 [shape = 'u32[]', space=smem, size = 0x4, offset = 0x4, fixed_abs, tag = 'smem constant byte address 0x4 - core index']
  #allocation1 [shape = 'u32[144,128]{1,0:T(1,128)}', space=vmem, size = 0x12000, scoped, tag = 'internal scratch']
  %s0 = inlined_call_operand.vmem [shape: bf16[8,128], index: 0, kind: input, shape index: {}]
  %s1 = inlined_call_operand.vmem [shape: bf16[64,8], index: 1, kind: input, shape index: {}]
  %s2 = inlined_call_operand.vmem [shape: bf16[256,64], index: 2, kind: input, shape index: {}]
  %s3 = inlined_call_operand.vmem [shape: bf16[4,128], index: 3, kind: input, shape index: {}]
  %s4 = inlined_call_operand.vmem [shape: f32[128,4], index: 4, kind: input, shape index: {}]
  %s5 = inlined_call_operand.vmem [shape: f32[4,128], index: 5, kind: output, shape index: {}]
  %s6 = sld [smem:[#allocation0]]
  $region30: #{fnn_forward.1} parent=0
    _
  %s8 = ssub.s32 1, %s6
  %s9 = scalar_select 0, %s8, %s6
  // Predicated region
  $region2: #{fnn_forward.1} parent=0 // pred_check
    _
  $region3: #{fnn_forward.1} parent=0 // pred_check_branch
    %11 = sbr.rel (0) target = $region5
  $region4: #{fnn_forward.1} parent=0 // pred_region
    _
  $region5: #{fnn_forward.1} parent=0 // pred_fallthru
    _
  // Predicated region
  $region6: #{fnn_forward.1} parent=0 // pred_check
    _
  $region7: #{fnn_forward.1} parent=0 // pred_check_branch
    %13 = sbr.rel (0) target = $region9
  $region8: #{fnn_forward.1} parent=0 // pred_region
    _
  $region9: #{fnn_forward.1} parent=0 // pred_fallthru
    _
  // Predicated region
  $region10: #{fnn_forward.1} parent=0 // pred_check
    _
  $region11: #{fnn_forward.1} parent=0 // pred_check_branch
    %15 = sbr.rel (0) target = $region13
  $region12: #{fnn_forward.1} parent=0 // pred_region
    _
  $region13: #{fnn_forward.1} parent=0 // pred_fallthru
    _
  // Predicated region
  $region14: #{fnn_forward.1} parent=0 // pred_check
    _
  $region15: #{fnn_forward.1} parent=0 // pred_check_branch
    %17 = sbr.rel (0) target = $region17
  $region16: #{fnn_forward.1} parent=0 // pred_region
    _
  $region17: #{fnn_forward.1} parent=0 // pred_fallthru
    _
  // Predicated region
  $region18: #{fnn_forward.1} parent=0 // pred_check
    _
  $region19: #{fnn_forward.1} parent=0 // pred_check_branch
    %19 = sbr.rel (0) target = $region21
  $region20: #{fnn_forward.1} parent=0 // pred_region
    _
  $region21: #{fnn_forward.1} parent=0 // pred_fallthru
    _
  %v21 = vld [vmem:[%s0] sm:$0xf]
  %v22 = vld [vmem:[%s4] sm:$0xff]
  %v23 = vld [vmem:[%s4 + $0x8] sm:$0xff]
  %v24 = vld [vmem:[%s4 + $0x10] sm:$0xff]
  %v25 = vld [vmem:[%s4 + $0x18] sm:$0xff]
  %v26 = vld [vmem:[%s4 + $0x20] sm:$0xff]
  %v27 = vld [vmem:[%s4 + $0x28] sm:$0xff]
  %v28 = vld [vmem:[%s4 + $0x30] sm:$0xff]
  %v29 = vld [vmem:[%s4 + $0x38] sm:$0xff]
  %v30 = vld [vmem:[%s4 + $0x40] sm:$0xff]
  %v31 = vld [vmem:[%s4 + $0x48] sm:$0xff]
  %v32 = vld [vmem:[%s4 + $0x50] sm:$0xff]
  %v33 = vld [vmem:[%s4 + $0x58] sm:$0xff]
  %v34 = vld [vmem:[%s4 + $0x60] sm:$0xff]
  %v35 = vld [vmem:[%s4 + $0x68] sm:$0xff]
  %v36 = vld [vmem:[%s4 + $0x70] sm:$0xff]
  %v37 = vld [vmem:[%s4 + $0x78] sm:$0xff]
  %v38 = vld [vmem:[%s4] sm:$0xf]
  %v39 = vld [vmem:[%s2] sm:$0xf]
  %v40 = vld [vmem:[%s2 + $0x4] sm:$0xf]
  %v41 = vld [vmem:[%s2 + $0x8] sm:$0xf]
  %v42 = vld [vmem:[%s2 + $0xc] sm:$0xf]
  %v43 = vld [vmem:[%s2 + $0x10] sm:$0xf]
  %v44 = vld [vmem:[%s2 + $0x14] sm:$0xf]
  %v45 = vld [vmem:[%s2 + $0x18] sm:$0xf]
  %v46 = vld [vmem:[%s2 + $0x1c] sm:$0xf]
  %v47 = vld [vmem:[%s2 + $0x20] sm:$0xf]
  %v48 = vld [vmem:[%s2 + $0x24] sm:$0xf]
  %v49 = vld [vmem:[%s2 + $0x28] sm:$0xf]
  %v50 = vld [vmem:[%s2 + $0x2c] sm:$0xf]
  %v51 = vld [vmem:[%s2 + $0x30] sm:$0xf]
  %v52 = vld [vmem:[%s2 + $0x34] sm:$0xf]
  %v53 = vld [vmem:[%s2 + $0x38] sm:$0xf]
  %v54 = vld [vmem:[%s2 + $0x3c] sm:$0xf]
  %v55 = vld [vmem:[%s2 + $0x40] sm:$0xf]
  %v56 = vld [vmem:[%s2 + $0x44] sm:$0xf]
  %v57 = vld [vmem:[%s2 + $0x48] sm:$0xf]
  %v58 = vld [vmem:[%s2 + $0x4c] sm:$0xf]
  %v59 = vld [vmem:[%s2 + $0x50] sm:$0xf]
  %v60 = vld [vmem:[%s2 + $0x54] sm:$0xf]
  %v61 = vld [vmem:[%s2 + $0x58] sm:$0xf]
  %v62 = vld [vmem:[%s2 + $0x5c] sm:$0xf]
  %v63 = vld [vmem:[%s2 + $0x60] sm:$0xf]
  %v64 = vld [vmem:[%s2 + $0x64] sm:$0xf]
  %v65 = vld [vmem:[%s2 + $0x68] sm:$0xf]
  %v66 = vld [vmem:[%s2 + $0x6c] sm:$0xf]
  %v67 = vld [vmem:[%s2 + $0x70] sm:$0xf]
  %v68 = vld [vmem:[%s2 + $0x74] sm:$0xf]
  %v69 = vld [vmem:[%s2 + $0x78] sm:$0xf]
  %v70 = vld [vmem:[%s2 + $0x7c] sm:$0xf]
  %v71 = vld [vmem:[%s1] sm:$0xf]
  %v72 = vld [vmem:[%s1 + $0x4] sm:$0xf]
  %v73 = vld [vmem:[%s1 + $0x8] sm:$0xf]
  %v74 = vld [vmem:[%s1 + $0xc] sm:$0xf]
  %v75 = vld [vmem:[%s1 + $0x10] sm:$0xf]
  %v76 = vld [vmem:[%s1 + $0x14] sm:$0xf]
  %v77 = vld [vmem:[%s1 + $0x18] sm:$0xf]
  %v78 = vld [vmem:[%s1 + $0x1c] sm:$0xf]
  %v87 = vunpack.c.l.b16 %v71
  %v88 = vunpack.c.l.b16 %v72
  %v89 = vunpack.c.l.b16 %v73
  %v90 = vunpack.c.l.b16 %v74
  %v91 = vunpack.c.l.b16 %v75
  %v92 = vunpack.c.l.b16 %v76
  %v93 = vunpack.c.l.b16 %v77
  %v94 = vunpack.c.l.b16 %v78
  %v95 = vpack.c.b16 %v88, %v87
  %v96 = vpack.c.b16 %v90, %v89
  %v97 = vpack.c.b16 %v92, %v91
  %v98 = vpack.c.b16 %v94, %v93
  %vm99 = vcmask 64512
  %v101 = vsel %vm99, %v95, 0
  %v104 = vsel %vm99, %v96, 0
  %v107 = vsel %vm99, %v97, 0
  %v110 = vsel %vm99, %v98, 0
  %vm112 = vcmask 1043456
  %v114 = vsel %vm112, %v21, 0
  %116 = vmatprep.subr.bf16.mxu0 0
  %117 = vmatpush1.bf16.msra.mxu0 %v114
  %118 = vmatprep.subr.bf16.mxu0 0
  %119 = vmatpush1.bf16.msra.mxu0 0
  %120 = vmatprep.subr.bf16.mxu0 0
  %121 = vmatpush1.bf16.msra.mxu0 0
  %122 = vmatprep.subr.bf16.mxu0 0
  %123 = vmatpush1.bf16.msra.mxu0 0
  %124 = vmatprep.subr.bf16.mxu0 0
  %125 = vmatpush1.bf16.msra.mxu0 0
  %126 = vmatprep.subr.bf16.mxu0 0
  %127 = vmatpush1.bf16.msra.mxu0 0
  %128 = vmatprep.subr.bf16.mxu0 0
  %129 = vmatpush1.bf16.msra.mxu0 0
  %130 = vmatprep.subr.bf16.mxu0 0
  %131 = vmatpush1.bf16.msra.mxu0 0
  %132 = vmatprep.subr.bf16.mxu0 0
  %133 = vmatpush1.bf16.msra.mxu0 0
  %134 = vmatprep.subr.bf16.mxu0 0
  %135 = vmatpush1.bf16.msra.mxu0 0
  %136 = vmatprep.subr.bf16.mxu0 0
  %137 = vmatpush1.bf16.msra.mxu0 0
  %138 = vmatprep.subr.bf16.mxu0 0
  %139 = vmatpush1.bf16.msra.mxu0 0
  %140 = vmatprep.subr.bf16.mxu0 0
  %141 = vmatpush1.bf16.msra.mxu0 0
  %142 = vmatprep.subr.bf16.mxu0 0
  %143 = vmatpush1.bf16.msra.mxu0 0
  %144 = vmatprep.subr.bf16.mxu0 0
  %145 = vmatpush1.bf16.msra.mxu0 0
  %146 = vmatprep.subr.bf16.mxu0 0
  %147 = vmatpush1.bf16.msra.mxu0 0
  %148 = vmatprep.mubr.bf16.mxu0 0
  %149 = vmatmul.mubr.bf16.gmra.mrb[0].mxu0 %v101
  %v150 = vpop.f32.mrb[0].mxu0
  %v151 = vadd.f32 0.0, %v150
  %v152 = vpop.f32.mrb[0].mxu0
  %v153 = vpop.f32.mrb[0].mxu0
  %v154 = vadd.f32 0.0, %v153
  %v155 = vpop.f32.mrb[0].mxu0
  %156 = vmatprep.mubr.bf16.mxu0 0
  %157 = vmatmul.mubr.bf16.gmra.mrb[0].mxu0 %v104
  %v158 = vpop.f32.mrb[0].mxu0
  %v159 = vadd.f32 0.0, %v158
  %v160 = vpop.f32.mrb[0].mxu0
  %v161 = vpop.f32.mrb[0].mxu0
  %v162 = vadd.f32 0.0, %v161
  %v163 = vpop.f32.mrb[0].mxu0
  %164 = vmatprep.mubr.bf16.mxu0 0
  %165 = vmatmul.mubr.bf16.gmra.mrb[0].mxu0 %v107
  %v166 = vpop.f32.mrb[0].mxu0
  %v167 = vadd.f32 0.0, %v166
  %v168 = vpop.f32.mrb[0].mxu0
  %v169 = vpop.f32.mrb[0].mxu0
  %v170 = vadd.f32 0.0, %v169
  %v171 = vpop.f32.mrb[0].mxu0
  %172 = vmatprep.mubr.bf16.mxu0 0
  %173 = vmatmul.mubr.bf16.gmra.mrb[0].mxu0 %v110
  %v174 = vpop.f32.mrb[0].mxu0
  %v175 = vadd.f32 0.0, %v174
  %v176 = vpop.f32.mrb[0].mxu0
  %v177 = vpop.f32.mrb[0].mxu0
  %v178 = vadd.f32 0.0, %v177
  %v179 = vpop.f32.mrb[0].mxu0
  %180 = vdwg.mxu0
  %v181 = vmax.f32 %v151, 0.0
  %v182 = vmax.f32 %v154, 0.0
  %v183 = vmax.f32 %v159, 0.0
  %v184 = vmax.f32 %v162, 0.0
  %v185 = vmax.f32 %v167, 0.0
  %v186 = vmax.f32 %v170, 0.0
  %v187 = vmax.f32 %v175, 0.0
  %v188 = vmax.f32 %v178, 0.0
  %v189 = vpack.c.bf16 %v182, %v181
  %v190 = vpack.c.bf16 %v184, %v183
  %v191 = vpack.c.bf16 %v186, %v185
  %v192 = vpack.c.bf16 %v188, %v187
  %194 = vset.pattern.permute.xlu0 1
  %195 = vperm.xlu0 %194, %v22
  %v196 = vpop.permute.xlu0 %195
  %199 = vset.pattern.permute.xlu0 1
  %200 = vperm.xlu0 %199, %v23
  %v201 = vpop.permute.xlu0 %200
  %204 = vset.pattern.permute.xlu0 1
  %205 = vperm.xlu0 %204, %v24
  %v206 = vpop.permute.xlu0 %205
  %209 = vset.pattern.permute.xlu0 1
  %210 = vperm.xlu0 %209, %v25
  %v211 = vpop.permute.xlu0 %210
  %214 = vset.pattern.permute.xlu0 1
  %215 = vperm.xlu0 %214, %v26
  %v216 = vpop.permute.xlu0 %215
  %219 = vset.pattern.permute.xlu0 1
  %220 = vperm.xlu0 %219, %v27
  %v221 = vpop.permute.xlu0 %220
  %224 = vset.pattern.permute.xlu0 1
  %225 = vperm.xlu0 %224, %v28
  %v226 = vpop.permute.xlu0 %225
  %229 = vset.pattern.permute.xlu0 1
  %230 = vperm.xlu0 %229, %v29
  %v231 = vpop.permute.xlu0 %230
  %v241 = vunpack.c.l.b16 %v39
  %v242 = vunpack.c.l.b16 %v40
  %v243 = vunpack.c.l.b16 %v41
  %v244 = vunpack.c.l.b16 %v42
  %v245 = vunpack.c.l.b16 %v43
  %v246 = vunpack.c.l.b16 %v44
  %v247 = vunpack.c.l.b16 %v45
  %v248 = vunpack.c.l.b16 %v46
  %v249 = vpack.c.b16 %v242, %v241
  %v250 = vpack.c.b16 %v244, %v243
  %v251 = vpack.c.b16 %v246, %v245
  %v252 = vpack.c.b16 %v248, %v247
  %vm253 = vcmask 523264
  %v255 = vsel %vm253, %v249, 0
  %v258 = vsel %vm253, %v250, 0
  %v261 = vsel %vm253, %v251, 0
  %v264 = vsel %vm253, %v252, 0
  %266 = vmatprep.subr.bf16.mxu0 0
  %267 = vmatpush1.bf16.msra.mxu0 %v189
  %268 = vmatprep.subr.bf16.mxu0 0
  %269 = vmatpush1.bf16.msra.mxu0 %v190
  %270 = vmatprep.subr.bf16.mxu0 0
  %271 = vmatpush1.bf16.msra.mxu0 %v191
  %272 = vmatprep.subr.bf16.mxu0 0
  %273 = vmatpush1.bf16.msra.mxu0 %v192
  %274 = vmatprep.subr.bf16.mxu0 0
  %275 = vmatpush1.bf16.msra.mxu0 0
  %276 = vmatprep.subr.bf16.mxu0 0
  %277 = vmatpush1.bf16.msra.mxu0 0
  %278 = vmatprep.subr.bf16.mxu0 0
  %279 = vmatpush1.bf16.msra.mxu0 0
  %280 = vmatprep.subr.bf16.mxu0 0
  %281 = vmatpush1.bf16.msra.mxu0 0
  %282 = vmatprep.subr.bf16.mxu0 0
  %283 = vmatpush1.bf16.msra.mxu0 0
  %284 = vmatprep.subr.bf16.mxu0 0
  %285 = vmatpush1.bf16.msra.mxu0 0
  %286 = vmatprep.subr.bf16.mxu0 0
  %287 = vmatpush1.bf16.msra.mxu0 0
  %288 = vmatprep.subr.bf16.mxu0 0
  %289 = vmatpush1.bf16.msra.mxu0 0
  %290 = vmatprep.subr.bf16.mxu0 0
  %291 = vmatpush1.bf16.msra.mxu0 0
  %292 = vmatprep.subr.bf16.mxu0 0
  %293 = vmatpush1.bf16.msra.mxu0 0
  %294 = vmatprep.subr.bf16.mxu0 0
  %295 = vmatpush1.bf16.msra.mxu0 0
  %296 = vmatprep.subr.bf16.mxu0 0
  %297 = vmatpush1.bf16.msra.mxu0 0
  %298 = vmatprep.mubr.bf16.mxu0 0
  %299 = vmatmul.mubr.bf16.gmra.mrb[0].mxu0 %v255
  %v300 = vpop.f32.mrb[0].mxu0
  %v301 = vadd.f32 %v196, %v300
  %v302 = vpop.f32.mrb[0].mxu0
  %v303 = vpop.f32.mrb[0].mxu0
  %v304 = vadd.f32 %v201, %v303
  %v305 = vpop.f32.mrb[0].mxu0
  %306 = vmatprep.mubr.bf16.mxu0 0
  %307 = vmatmul.mubr.bf16.gmra.mrb[0].mxu0 %v258
  %v308 = vpop.f32.mrb[0].mxu0
  %v309 = vadd.f32 %v206, %v308
  %v310 = vpop.f32.mrb[0].mxu0
  %v311 = vpop.f32.mrb[0].mxu0
  %v312 = vadd.f32 %v211, %v311
  %v313 = vpop.f32.mrb[0].mxu0
  %314 = vmatprep.mubr.bf16.mxu0 0
  %315 = vmatmul.mubr.bf16.gmra.mrb[0].mxu0 %v261
  %v316 = vpop.f32.mrb[0].mxu0
  %v317 = vadd.f32 %v216, %v316
  %v318 = vpop.f32.mrb[0].mxu0
  %v319 = vpop.f32.mrb[0].mxu0
  %v320 = vadd.f32 %v221, %v319
  %v321 = vpop.f32.mrb[0].mxu0
  %322 = vmatprep.mubr.bf16.mxu0 0
  %323 = vmatmul.mubr.bf16.gmra.mrb[0].mxu0 %v264
  %v324 = vpop.f32.mrb[0].mxu0
  %v325 = vadd.f32 %v226, %v324
  %v326 = vpop.f32.mrb[0].mxu0
  %v327 = vpop.f32.mrb[0].mxu0
  %v328 = vadd.f32 %v231, %v327
  %v329 = vpop.f32.mrb[0].mxu0
  %330 = vdwg.mxu0
  %v331 = vmax.f32 %v301, 0.0
  %v332 = vmax.f32 %v304, 0.0
  %v333 = vmax.f32 %v309, 0.0
  %v334 = vmax.f32 %v312, 0.0
  %v335 = vmax.f32 %v317, 0.0
  %v336 = vmax.f32 %v320, 0.0
  %v337 = vmax.f32 %v325, 0.0
  %v338 = vmax.f32 %v328, 0.0
  %339 = vset.pattern.permute.xlu0 2
  %340 = vperm.xlu0 %339, %v22
  %v341 = vpop.permute.xlu0 %340
  %343 = vset.pattern.permute.xlu0 2
  %344 = vperm.xlu0 %343, %v23
  %v345 = vpop.permute.xlu0 %344
  %347 = vset.pattern.permute.xlu0 2
  %348 = vperm.xlu0 %347, %v24
  %v349 = vpop.permute.xlu0 %348
  %351 = vset.pattern.permute.xlu0 2
  %352 = vperm.xlu0 %351, %v25
  %v353 = vpop.permute.xlu0 %352
  %355 = vset.pattern.permute.xlu0 2
  %356 = vperm.xlu0 %355, %v26
  %v357 = vpop.permute.xlu0 %356
  %359 = vset.pattern.permute.xlu0 2
  %360 = vperm.xlu0 %359, %v27
  %v361 = vpop.permute.xlu0 %360
  %363 = vset.pattern.permute.xlu0 2
  %364 = vperm.xlu0 %363, %v28
  %v365 = vpop.permute.xlu0 %364
  %367 = vset.pattern.permute.xlu0 2
  %368 = vperm.xlu0 %367, %v29
  %v369 = vpop.permute.xlu0 %368
  %v371 = vmul.f32 %v331, %v341
  %v372 = vmul.f32 %v332, %v345
  %v373 = vmul.f32 %v333, %v349
  %v374 = vmul.f32 %v334, %v353
  %v375 = vmul.f32 %v335, %v357
  %v376 = vmul.f32 %v336, %v361
  %v377 = vmul.f32 %v337, %v365
  %v378 = vmul.f32 %v338, %v369
  %380 = vset.pattern.permute.xlu0 2
  %381 = vperm.xlu0 %380, %v30
  %v382 = vpop.permute.xlu0 %381
  %385 = vset.pattern.permute.xlu0 2
  %386 = vperm.xlu0 %385, %v31
  %v387 = vpop.permute.xlu0 %386
  %390 = vset.pattern.permute.xlu0 2
  %391 = vperm.xlu0 %390, %v32
  %v392 = vpop.permute.xlu0 %391
  %395 = vset.pattern.permute.xlu0 2
  %396 = vperm.xlu0 %395, %v33
  %v397 = vpop.permute.xlu0 %396
  %400 = vset.pattern.permute.xlu0 2
  %401 = vperm.xlu0 %400, %v34
  %v402 = vpop.permute.xlu0 %401
  %405 = vset.pattern.permute.xlu0 2
  %406 = vperm.xlu0 %405, %v35
  %v407 = vpop.permute.xlu0 %406
  %410 = vset.pattern.permute.xlu0 2
  %411 = vperm.xlu0 %410, %v36
  %v412 = vpop.permute.xlu0 %411
  %415 = vset.pattern.permute.xlu0 2
  %416 = vperm.xlu0 %415, %v37
  %v417 = vpop.permute.xlu0 %416
  %v419 = vadd.f32 %v371, %v382
  %v420 = vadd.f32 %v372, %v387
  %v421 = vadd.f32 %v373, %v392
  %v422 = vadd.f32 %v374, %v397
  %v423 = vadd.f32 %v375, %v402
  %v424 = vadd.f32 %v376, %v407
  %v425 = vadd.f32 %v377, %v412
  %v426 = vadd.f32 %v378, %v417
  %v427 = vmax.f32 %v419, 0.0
  %v428 = vmax.f32 %v420, 0.0
  %v429 = vmax.f32 %v421, 0.0
  %v430 = vmax.f32 %v422, 0.0
  %v431 = vmax.f32 %v423, 0.0
  %v432 = vmax.f32 %v424, 0.0
  %v433 = vmax.f32 %v425, 0.0
  %v434 = vmax.f32 %v426, 0.0
  %v435 = vpack.c.bf16 %v428, %v427
  %v436 = vpack.c.bf16 %v430, %v429
  %v437 = vpack.c.bf16 %v432, %v431
  %v438 = vpack.c.bf16 %v434, %v433
  %439 = vset.pattern.permute.xlu0 1
  %440 = vperm.xlu0 %439, %v30
  %v441 = vpop.permute.xlu0 %440
  %443 = vset.pattern.permute.xlu0 1
  %444 = vperm.xlu0 %443, %v31
  %v445 = vpop.permute.xlu0 %444
  %447 = vset.pattern.permute.xlu0 1
  %448 = vperm.xlu0 %447, %v32
  %v449 = vpop.permute.xlu0 %448
  %451 = vset.pattern.permute.xlu0 1
  %452 = vperm.xlu0 %451, %v33
  %v453 = vpop.permute.xlu0 %452
  %455 = vset.pattern.permute.xlu0 1
  %456 = vperm.xlu0 %455, %v34
  %v457 = vpop.permute.xlu0 %456
  %459 = vset.pattern.permute.xlu0 1
  %460 = vperm.xlu0 %459, %v35
  %v461 = vpop.permute.xlu0 %460
  %463 = vset.pattern.permute.xlu0 1
  %464 = vperm.xlu0 %463, %v36
  %v465 = vpop.permute.xlu0 %464
  %467 = vset.pattern.permute.xlu0 1
  %468 = vperm.xlu0 %467, %v37
  %v469 = vpop.permute.xlu0 %468
  %v479 = vunpack.c.l.b16 %v47
  %v480 = vunpack.c.l.b16 %v48
  %v481 = vunpack.c.l.b16 %v49
  %v482 = vunpack.c.l.b16 %v50
  %v483 = vunpack.c.l.b16 %v51
  %v484 = vunpack.c.l.b16 %v52
  %v485 = vunpack.c.l.b16 %v53
  %v486 = vunpack.c.l.b16 %v54
  %v487 = vpack.c.b16 %v480, %v479
  %v488 = vpack.c.b16 %v482, %v481
  %v489 = vpack.c.b16 %v484, %v483
  %v490 = vpack.c.b16 %v486, %v485
  %v492 = vsel %vm253, %v487, 0
  %v495 = vsel %vm253, %v488, 0
  %v498 = vsel %vm253, %v489, 0
  %v501 = vsel %vm253, %v490, 0
  %503 = vmatprep.subr.bf16.mxu0 0
  %504 = vmatpush1.bf16.msra.mxu0 %v435
  %505 = vmatprep.subr.bf16.mxu0 0
  %506 = vmatpush1.bf16.msra.mxu0 %v436
  %507 = vmatprep.subr.bf16.mxu0 0
  %508 = vmatpush1.bf16.msra.mxu0 %v437
  %509 = vmatprep.subr.bf16.mxu0 0
  %510 = vmatpush1.bf16.msra.mxu0 %v438
  %511 = vmatprep.subr.bf16.mxu0 0
  %512 = vmatpush1.bf16.msra.mxu0 0
  %513 = vmatprep.subr.bf16.mxu0 0
  %514 = vmatpush1.bf16.msra.mxu0 0
  %515 = vmatprep.subr.bf16.mxu0 0
  %516 = vmatpush1.bf16.msra.mxu0 0
  %517 = vmatprep.subr.bf16.mxu0 0
  %518 = vmatpush1.bf16.msra.mxu0 0
  %519 = vmatprep.subr.bf16.mxu0 0
  %520 = vmatpush1.bf16.msra.mxu0 0
  %521 = vmatprep.subr.bf16.mxu0 0
  %522 = vmatpush1.bf16.msra.mxu0 0
  %523 = vmatprep.subr.bf16.mxu0 0
  %524 = vmatpush1.bf16.msra.mxu0 0
  %525 = vmatprep.subr.bf16.mxu0 0
  %526 = vmatpush1.bf16.msra.mxu0 0
  %527 = vmatprep.subr.bf16.mxu0 0
  %528 = vmatpush1.bf16.msra.mxu0 0
  %529 = vmatprep.subr.bf16.mxu0 0
  %530 = vmatpush1.bf16.msra.mxu0 0
  %531 = vmatprep.subr.bf16.mxu0 0
  %532 = vmatpush1.bf16.msra.mxu0 0
  %533 = vmatprep.subr.bf16.mxu0 0
  %534 = vmatpush1.bf16.msra.mxu0 0
  %535 = vmatprep.mubr.bf16.mxu0 0
  %536 = vmatmul.mubr.bf16.gmra.mrb[0].mxu0 %v492
  %v537 = vpop.f32.mrb[0].mxu0
  %v538 = vadd.f32 %v441, %v537
  %v539 = vpop.f32.mrb[0].mxu0
  %v540 = vpop.f32.mrb[0].mxu0
  %v541 = vadd.f32 %v445, %v540
  %v542 = vpop.f32.mrb[0].mxu0
  %543 = vmatprep.mubr.bf16.mxu0 0
  %544 = vmatmul.mubr.bf16.gmra.mrb[0].mxu0 %v495
  %v545 = vpop.f32.mrb[0].mxu0
  %v546 = vadd.f32 %v449, %v545
  %v547 = vpop.f32.mrb[0].mxu0
  %v548 = vpop.f32.mrb[0].mxu0
  %v549 = vadd.f32 %v453, %v548
  %v550 = vpop.f32.mrb[0].mxu0
  %551 = vmatprep.mubr.bf16.mxu0 0
  %552 = vmatmul.mubr.bf16.gmra.mrb[0].mxu0 %v498
  %v553 = vpop.f32.mrb[0].mxu0
  %v554 = vadd.f32 %v457, %v553
  %v555 = vpop.f32.mrb[0].mxu0
  %v556 = vpop.f32.mrb[0].mxu0
  %v557 = vadd.f32 %v461, %v556
  %v558 = vpop.f32.mrb[0].mxu0
  %559 = vmatprep.mubr.bf16.mxu0 0
  %560 = vmatmul.mubr.bf16.gmra.mrb[0].mxu0 %v501
  %v561 = vpop.f32.mrb[0].mxu0
  %v562 = vadd.f32 %v465, %v561
  %v563 = vpop.f32.mrb[0].mxu0
  %v564 = vpop.f32.mrb[0].mxu0
  %v565 = vadd.f32 %v469, %v564
  %v566 = vpop.f32.mrb[0].mxu0
  %567 = vdwg.mxu0
  %v568 = vmax.f32 %v538, 0.0
  %v569 = vmax.f32 %v541, 0.0
  %v570 = vmax.f32 %v546, 0.0
  %v571 = vmax.f32 %v549, 0.0
  %v572 = vmax.f32 %v554, 0.0
  %v573 = vmax.f32 %v557, 0.0
  %v574 = vmax.f32 %v562, 0.0
  %v575 = vmax.f32 %v565, 0.0
  %v576 = vpack.c.bf16 %v569, %v568
  %v577 = vpack.c.bf16 %v571, %v570
  %v578 = vpack.c.bf16 %v573, %v572
  %v579 = vpack.c.bf16 %v575, %v574
  %580 = vset.pattern.permute.xlu0 0
  %581 = vperm.xlu0 %580, %v22
  %v582 = vpop.permute.xlu0 %581
  %584 = vset.pattern.permute.xlu0 0
  %585 = vperm.xlu0 %584, %v23
  %v586 = vpop.permute.xlu0 %585
  %588 = vset.pattern.permute.xlu0 0
  %589 = vperm.xlu0 %588, %v24
  %v590 = vpop.permute.xlu0 %589
  %592 = vset.pattern.permute.xlu0 0
  %593 = vperm.xlu0 %592, %v25
  %v594 = vpop.permute.xlu0 %593
  %596 = vset.pattern.permute.xlu0 0
  %597 = vperm.xlu0 %596, %v26
  %v598 = vpop.permute.xlu0 %597
  %600 = vset.pattern.permute.xlu0 0
  %601 = vperm.xlu0 %600, %v27
  %v602 = vpop.permute.xlu0 %601
  %604 = vset.pattern.permute.xlu0 0
  %605 = vperm.xlu0 %604, %v28
  %v606 = vpop.permute.xlu0 %605
  %608 = vset.pattern.permute.xlu0 0
  %609 = vperm.xlu0 %608, %v29
  %v610 = vpop.permute.xlu0 %609
  %612 = vset.pattern.permute.xlu0 0
  %613 = vperm.xlu0 %612, %v30
  %v614 = vpop.permute.xlu0 %613
  %616 = vset.pattern.permute.xlu0 0
  %617 = vperm.xlu0 %616, %v31
  %v618 = vpop.permute.xlu0 %617
  %620 = vset.pattern.permute.xlu0 0
  %621 = vperm.xlu0 %620, %v32
  %v622 = vpop.permute.xlu0 %621
  %624 = vset.pattern.permute.xlu0 0
  %625 = vperm.xlu0 %624, %v33
  %v626 = vpop.permute.xlu0 %625
  %628 = vset.pattern.permute.xlu0 0
  %629 = vperm.xlu0 %628, %v34
  %v630 = vpop.permute.xlu0 %629
  %632 = vset.pattern.permute.xlu0 0
  %633 = vperm.xlu0 %632, %v35
  %v634 = vpop.permute.xlu0 %633
  %636 = vset.pattern.permute.xlu0 0
  %637 = vperm.xlu0 %636, %v36
  %v638 = vpop.permute.xlu0 %637
  %640 = vset.pattern.permute.xlu0 0
  %641 = vperm.xlu0 %640, %v37
  %v642 = vpop.permute.xlu0 %641
  %v660 = vunpack.c.l.b16 %v55
  %v661 = vunpack.c.l.b16 %v56
  %v662 = vunpack.c.l.b16 %v57
  %v663 = vunpack.c.l.b16 %v58
  %v664 = vunpack.c.l.b16 %v59
  %v665 = vunpack.c.l.b16 %v60
  %v666 = vunpack.c.l.b16 %v61
  %v667 = vunpack.c.l.b16 %v62
  %v668 = vunpack.c.l.b16 %v63
  %v669 = vunpack.c.l.b16 %v64
  %v670 = vunpack.c.l.b16 %v65
  %v671 = vunpack.c.l.b16 %v66
  %v672 = vunpack.c.l.b16 %v67
  %v673 = vunpack.c.l.b16 %v68
  %v674 = vunpack.c.l.b16 %v69
  %v675 = vunpack.c.l.b16 %v70
  %v676 = vpack.c.b16 %v661, %v660
  %v677 = vpack.c.b16 %v663, %v662
  %v678 = vpack.c.b16 %v665, %v664
  %v679 = vpack.c.b16 %v667, %v666
  %v680 = vpack.c.b16 %v669, %v668
  %v681 = vpack.c.b16 %v671, %v670
  %v682 = vpack.c.b16 %v673, %v672
  %v683 = vpack.c.b16 %v675, %v674
  %v685 = vsel %vm253, %v676, 0
  %v688 = vsel %vm253, %v677, 0
  %v691 = vsel %vm253, %v678, 0
  %v694 = vsel %vm253, %v679, 0
  %v697 = vsel %vm253, %v680, 0
  %v700 = vsel %vm253, %v681, 0
  %v703 = vsel %vm253, %v682, 0
  %v706 = vsel %vm253, %v683, 0
  %708 = vmatprep.subr.bf16.mxu0 0
  %709 = vmatpush1.bf16.msra.mxu0 %v576
  %710 = vmatprep.subr.bf16.mxu0 0
  %711 = vmatpush1.bf16.msra.mxu0 %v577
  %712 = vmatprep.subr.bf16.mxu0 0
  %713 = vmatpush1.bf16.msra.mxu0 %v578
  %714 = vmatprep.subr.bf16.mxu0 0
  %715 = vmatpush1.bf16.msra.mxu0 %v579
  %716 = vmatprep.subr.bf16.mxu0 0
  %717 = vmatpush1.bf16.msra.mxu0 0
  %718 = vmatprep.subr.bf16.mxu0 0
  %719 = vmatpush1.bf16.msra.mxu0 0
  %720 = vmatprep.subr.bf16.mxu0 0
  %721 = vmatpush1.bf16.msra.mxu0 0
  %722 = vmatprep.subr.bf16.mxu0 0
  %723 = vmatpush1.bf16.msra.mxu0 0
  %724 = vmatprep.subr.bf16.mxu0 0
  %725 = vmatpush1.bf16.msra.mxu0 0
  %726 = vmatprep.subr.bf16.mxu0 0
  %727 = vmatpush1.bf16.msra.mxu0 0
  %728 = vmatprep.subr.bf16.mxu0 0
  %729 = vmatpush1.bf16.msra.mxu0 0
  %730 = vmatprep.subr.bf16.mxu0 0
  %731 = vmatpush1.bf16.msra.mxu0 0
  %732 = vmatprep.subr.bf16.mxu0 0
  %733 = vmatpush1.bf16.msra.mxu0 0
  %734 = vmatprep.subr.bf16.mxu0 0
  %735 = vmatpush1.bf16.msra.mxu0 0
  %736 = vmatprep.subr.bf16.mxu0 0
  %737 = vmatpush1.bf16.msra.mxu0 0
  %738 = vmatprep.subr.bf16.mxu0 0
  %739 = vmatpush1.bf16.msra.mxu0 0
  %740 = vmatprep.mubr.bf16.mxu0 0
  %741 = vmatmul.mubr.bf16.gmra.mrb[0].mxu0 %v685
  %v742 = vpop.f32.mrb[0].mxu0
  %v743 = vadd.f32 %v582, %v742
  %v744 = vpop.f32.mrb[0].mxu0
  %v745 = vpop.f32.mrb[0].mxu0
  %v746 = vadd.f32 %v586, %v745
  %v747 = vpop.f32.mrb[0].mxu0
  %748 = vmatprep.mubr.bf16.mxu0 0
  %749 = vmatmul.mubr.bf16.gmra.mrb[0].mxu0 %v688
  %v750 = vpop.f32.mrb[0].mxu0
  %v751 = vadd.f32 %v590, %v750
  %v752 = vpop.f32.mrb[0].mxu0
  %v753 = vpop.f32.mrb[0].mxu0
  %v754 = vadd.f32 %v594, %v753
  %v755 = vpop.f32.mrb[0].mxu0
  %756 = vmatprep.mubr.bf16.mxu0 0
  %757 = vmatmul.mubr.bf16.gmra.mrb[0].mxu0 %v691
  %v758 = vpop.f32.mrb[0].mxu0
  %v759 = vadd.f32 %v598, %v758
  %v760 = vpop.f32.mrb[0].mxu0
  %v761 = vpop.f32.mrb[0].mxu0
  %v762 = vadd.f32 %v602, %v761
  %v763 = vpop.f32.mrb[0].mxu0
  %764 = vmatprep.mubr.bf16.mxu0 0
  %765 = vmatmul.mubr.bf16.gmra.mrb[0].mxu0 %v694
  %v766 = vpop.f32.mrb[0].mxu0
  %v767 = vadd.f32 %v606, %v766
  %v768 = vpop.f32.mrb[0].mxu0
  %v769 = vpop.f32.mrb[0].mxu0
  %v770 = vadd.f32 %v610, %v769
  %v771 = vpop.f32.mrb[0].mxu0
  %772 = vmatprep.mubr.bf16.mxu0 0
  %773 = vmatmul.mubr.bf16.gmra.mrb[0].mxu0 %v697
  %v774 = vpop.f32.mrb[0].mxu0
  %v775 = vadd.f32 %v614, %v774
  %v776 = vpop.f32.mrb[0].mxu0
  %v777 = vpop.f32.mrb[0].mxu0
  %v778 = vadd.f32 %v618, %v777
  %v779 = vpop.f32.mrb[0].mxu0
  %780 = vmatprep.mubr.bf16.mxu0 0
  %781 = vmatmul.mubr.bf16.gmra.mrb[0].mxu0 %v700
  %v782 = vpop.f32.mrb[0].mxu0
  %v783 = vadd.f32 %v622, %v782
  %v784 = vpop.f32.mrb[0].mxu0
  %v785 = vpop.f32.mrb[0].mxu0
  %v786 = vadd.f32 %v626, %v785
  %v787 = vpop.f32.mrb[0].mxu0
  %788 = vmatprep.mubr.bf16.mxu0 0
  %789 = vmatmul.mubr.bf16.gmra.mrb[0].mxu0 %v703
  %v790 = vpop.f32.mrb[0].mxu0
  %v791 = vadd.f32 %v630, %v790
  %v792 = vpop.f32.mrb[0].mxu0
  %v793 = vpop.f32.mrb[0].mxu0
  %v794 = vadd.f32 %v634, %v793
  %v795 = vpop.f32.mrb[0].mxu0
  %796 = vmatprep.mubr.bf16.mxu0 0
  %797 = vmatmul.mubr.bf16.gmra.mrb[0].mxu0 %v706
  %v798 = vpop.f32.mrb[0].mxu0
  %v799 = vadd.f32 %v638, %v798
  %v800 = vpop.f32.mrb[0].mxu0
  %v801 = vpop.f32.mrb[0].mxu0
  %v802 = vadd.f32 %v642, %v801
  %v803 = vpop.f32.mrb[0].mxu0
  %804 = vdwg.mxu0
  %v805 = vmax.f32 %v743, 0.0
  %v806 = vmax.f32 %v746, 0.0
  %v807 = vmax.f32 %v751, 0.0
  %v808 = vmax.f32 %v754, 0.0
  %v809 = vmax.f32 %v759, 0.0
  %v810 = vmax.f32 %v762, 0.0
  %v811 = vmax.f32 %v767, 0.0
  %v812 = vmax.f32 %v770, 0.0
  %v813 = vmax.f32 %v775, 0.0
  %v814 = vmax.f32 %v778, 0.0
  %v815 = vmax.f32 %v783, 0.0
  %v816 = vmax.f32 %v786, 0.0
  %v817 = vmax.f32 %v791, 0.0
  %v818 = vmax.f32 %v794, 0.0
  %v819 = vmax.f32 %v799, 0.0
  %v820 = vmax.f32 %v802, 0.0
  %v821 = vld [vmem:[%s3] sm:$0x3]
  %v822 = vpack.c.bf16 %v806, %v805
  %v823 = vpack.c.bf16 %v808, %v807
  %v824 = vpack.c.bf16 %v810, %v809
  %v825 = vpack.c.bf16 %v812, %v811
  %v826 = vpack.c.bf16 %v814, %v813
  %v827 = vpack.c.bf16 %v816, %v815
  %v828 = vpack.c.bf16 %v818, %v817
  %v829 = vpack.c.bf16 %v820, %v819
  %831 = vset.pattern.permute.xlu0 3
  %832 = vperm.xlu0 %831, %v38
  %v833 = vpop.permute.xlu0 %832
  %835 = vmatprep.subr.bf16.mxu0 0
  %836 = vmatpush1.bf16.msra.mxu0 %v822
  %837 = vmatprep.subr.bf16.mxu0 0
  %838 = vmatpush1.bf16.msra.mxu0 %v823
  %839 = vmatprep.subr.bf16.mxu0 0
  %840 = vmatpush1.bf16.msra.mxu0 %v824
  %841 = vmatprep.subr.bf16.mxu0 0
  %842 = vmatpush1.bf16.msra.mxu0 %v825
  %843 = vmatprep.subr.bf16.mxu0 0
  %844 = vmatpush1.bf16.msra.mxu0 %v826
  %845 = vmatprep.subr.bf16.mxu0 0
  %846 = vmatpush1.bf16.msra.mxu0 %v827
  %847 = vmatprep.subr.bf16.mxu0 0
  %848 = vmatpush1.bf16.msra.mxu0 %v828
  %849 = vmatprep.subr.bf16.mxu0 0
  %850 = vmatpush1.bf16.msra.mxu0 %v829
  %851 = vmatprep.subr.bf16.mxu0 0
  %852 = vmatpush1.bf16.msra.mxu0 0
  %853 = vmatprep.subr.bf16.mxu0 0
  %854 = vmatpush1.bf16.msra.mxu0 0
  %855 = vmatprep.subr.bf16.mxu0 0
  %856 = vmatpush1.bf16.msra.mxu0 0
  %857 = vmatprep.subr.bf16.mxu0 0
  %858 = vmatpush1.bf16.msra.mxu0 0
  %859 = vmatprep.subr.bf16.mxu0 0
  %860 = vmatpush1.bf16.msra.mxu0 0
  %861 = vmatprep.subr.bf16.mxu0 0
  %862 = vmatpush1.bf16.msra.mxu0 0
  %863 = vmatprep.subr.bf16.mxu0 0
  %864 = vmatpush1.bf16.msra.mxu0 0
  %865 = vmatprep.subr.bf16.mxu0 0
  %866 = vmatpush1.bf16.msra.mxu0 0
  %867 = vmatprep.mubr.bf16.mxu0 0
  %868 = vmatmul.mubr.bf16.gmra.mrb[0].mxu0 %v821
  %v869 = vpop.f32.mrb[0].mxu0
  %v870 = vadd.f32 %v833, %v869
  %v871 = vpop.f32.mrb[0].mxu0
  %v872 = vpop.f32.mrb[0].mxu0
  %v873 = vpop.f32.mrb[0].mxu0
  %874 = vdwg.mxu0
  %875 = vst [vmem:[%s5] sm:$0xf] %v870
  // Predicated region
  $region22: #{fnn_forward.1} parent=0 // pred_check
    _
  $region23: #{fnn_forward.1} parent=0 // pred_check_branch
    %877 = sbr.rel (0) target = $region25
  $region24: #{fnn_forward.1} parent=0 // pred_region
    _
  $region25: #{fnn_forward.1} parent=0 // pred_fallthru
    _
  // Predicated region
  $region26: #{fnn_forward.1} parent=0 // pred_check
    _
  $region27: #{fnn_forward.1} parent=0 // pred_check_branch
    %879 = sbr.rel (0) target = $region29
  $region28: #{fnn_forward.1} parent=0 // pred_region
    _
  $region29: #{fnn_forward.1} parent=0 // pred_fallthru
    _

</llo_original>
